<compile_context>
chip_gen: v7x
topology: tpu7x:2x2x1
jax: 0.10.0
libtpu: 0.0.40
codegen_flags: <defaults>
</compile_context>

<pallas_src>
import functools

import jax
import jax.numpy as jnp
from jax.experimental import pallas as pl
from jax.experimental.pallas import tpu as pltpu


def regression_net_kernel(x_ref, w1_ref, b1_ref, w2_ref, b2_ref, o_ref, *,
                          chunk, bf16_exp):
    # x_ref: (1, TILE) lane-dense batch tile (VMEM)
    # w1/b1/w2: (H, 1) columns (VMEM, resident across grid steps)
    # b2: (1, 1) scalar (SMEM)
    # Hoist weight loads / casts out of the chunk loop.
    w1 = w1_ref[...]                                     # (H, 1)
    b1 = b1_ref[...]                                     # (H, 1)
    w2 = w2_ref[...]                                     # (H, 1)
    w2c = w2.astype(jnp.bfloat16) if bf16_exp else w2
    b2 = b2_ref[0, 0]                                    # scalar

    tile = x_ref.shape[1]
    n_chunks = tile // chunk                             # static; tile % chunk == 0

    def body(c, carry):
        start = pl.multiple_of(c * chunk, chunk)         # chunk is a multiple of 128
        x = x_ref[:, pl.ds(start, chunk)]                # (1, C) batch slice

        # fc1: K=1 contraction -> pure VPU broadcast FMA (no MXU round-trip).
        h = w1 * x + b1                                  # (H, C)

        # Numerically stable softmax pieces (reductions over the sublane axis).
        m = jnp.max(h, axis=0, keepdims=True)            # (1, C)  XLU
        z = h - m
        e = jnp.exp(z.astype(jnp.bfloat16) if bf16_exp else z)   # (H, C)  EUP

        # fc2 fused with the softmax normalization:
        #   y = (sum_j e_j * w2_j) / (sum_j e_j) + b2
        num = jnp.sum(e * w2c, axis=0, keepdims=True, dtype=jnp.float32)  # (1, C)
        den = jnp.sum(e, axis=0, keepdims=True, dtype=jnp.float32)        # (1, C)
        y = num / den + b2                               # exact divide, only (1, C)

        o_ref[:, pl.ds(start, chunk)] = y.astype(o_ref.dtype)
        return carry

    jax.lax.fori_loop(0, n_chunks, body, 0)


def _round_up(a, b):
    return ((a + b - 1) // b) * b


def regression_net(x, w1, b1, w2, b2, *, tile_n=8192, bf16_exp=False):
    """Forward pass of RegressionNet.

    x:  (N, 1) float32
    w1: (H, 1), b1: (H, 1)   -- fc1 weight/bias (torch fc1.weight is (H,1), bias (H,))
    w2: (H, 1), b2: (1, 1)   -- fc2 weight/bias (torch fc2.weight is (1,H), bias (1,))
    bf16_exp: run the (H, C) elementwise/exp path in bf16 (v6e/v7x throughput knob;
              keep False on v5e or when full f32 accuracy is required).
    Returns (N, 1).
    """
    n = x.shape[0]
    hidden = w1.shape[0]
    lane = 128

    # ---- Tile selection (lane-dense: batch lives on the lane axis) ----------
    n_blk = max(_round_up(n, lane), lane)                 # lane-aligned batch extent
    tile = min(max(_round_up(tile_n, lane), lane), n_blk)
    # v7x: guarantee >=2 grid steps when there is enough work so the "parallel"
    # grid axis can shard across both TensorCores (harmless on v5e/v6e).
    if tile == n_blk and n_blk >= 2 * lane:
        tile = _round_up(pl.cdiv(n_blk, 2), lane)

    # ---- Inner lane-chunk: largest multiple of 128 (<=512) dividing the tile,
    # capped so ~3 live (H, chunk) f32 temporaries stay far below v7x's 32 MiB
    # scoped VMEM (and vreg-resident at small H). --------------------------------
    t = tile // lane
    budget = 8 << 20
    chunk = lane
    for c in (4, 3, 2):
        if t % c == 0 and hidden * (lane * c) * 4 * 3 <= budget:
            chunk = lane * c
            break

    grid = (pl.cdiv(n, tile),)

    # No wrapper-side jnp.pad (it would be a full extra HBM read+write of x):
    # Pallas masks the partial last block; garbage tail lanes only affect
    # discarded, per-column-independent results.
    x_flat = x.reshape(1, n)
    b2_smem = b2.reshape(1, 1).astype(jnp.float32)

    kernel = functools.partial(regression_net_kernel, chunk=chunk, bf16_exp=bf16_exp)

    out = pl.pallas_call(
        kernel,
        out_shape=jax.ShapeDtypeStruct((1, n), x.dtype),
        grid=grid,
        in_specs=[
            pl.BlockSpec((1, tile), lambda i: (0, i)),        # x: lane-dense tile per step
            pl.BlockSpec((hidden, 1), lambda i: (0, 0)),      # w1: VMEM-resident
            pl.BlockSpec((hidden, 1), lambda i: (0, 0)),      # b1: VMEM-resident
            pl.BlockSpec((hidden, 1), lambda i: (0, 0)),      # w2: VMEM-resident
            pl.BlockSpec(memory_space=pltpu.SMEM),            # b2: scalar in SMEM
        ],
        out_specs=pl.BlockSpec((1, tile), lambda i: (0, i)),  # lane-dense output slab
        compiler_params=pltpu.CompilerParams(
            dimension_semantics=("parallel",),                # shard steps on v7x's 2 TCs
            vmem_limit_bytes=32 << 20,
        ),
    )(x_flat, w1, b1, w2, b2_smem)

    return out[0].reshape(n, 1)


def init_params(key, hidden0):
    """Deterministic init matching torch.nn.Linear default (U[-1/sqrt(fan_in), ...]),
    laid out in the kernel's (H, 1) column format."""
    k1, k2, k3, k4 = jax.random.split(key, 4)
    bound1 = 1.0                        # fc1: fan_in = 1
    w1 = jax.random.uniform(k1, (hidden0, 1), jnp.float32, -bound1, bound1)
    b1 = jax.random.uniform(k2, (hidden0, 1), jnp.float32, -bound1, bound1)
    bound2 = 1.0 / (hidden0 ** 0.5)     # fc2: fan_in = hidden0
    w2 = jax.random.uniform(k3, (hidden0, 1), jnp.float32, -bound2, bound2)
    b2 = jax.random.uniform(k4, (1, 1), jnp.float32, -bound2, bound2)
    return w1, b1, w2, b2


if __name__ == "__main__":
    key = jax.random.PRNGKey(0)
    hidden0 = 32
    batch = 8

    kx, kp = jax.random.split(key)
    x = jax.random.normal(kx, (batch, 1), jnp.float32)
    w1, b1, w2, b2 = init_params(kp, hidden0)

    out = regression_net(x, w1, b1, w2, b2)
    out = jax.block_until_ready(out)

    # Pure-JAX reference of the same forward pass (natural row-major layout).
    h_ref = x @ w1.T + b1.T                 # (N, H)
    s_ref = jax.nn.softmax(h_ref, axis=1)   # softmax over dim=1
    y_ref = s_ref @ w2 + b2                 # (N, 1)

    assert out.shape == (batch, 1)
    # Exact divide on the fused (1, C) denominator -> f32-tight tolerance.
    assert jnp.allclose(out, y_ref, atol=1e-5, rtol=1e-5), (
        f"max abs err = {jnp.max(jnp.abs(out - y_ref))}"
    )

    print("KERNEL_OK")
</pallas_src>

<mosaic_0001>
module attributes {stable_mosaic.version = 11 : i64} {
  func.func @regression_net_kernel(%arg0: i32, %arg1: memref<1x128xf32, #tpu.memory_space<vmem>>, %arg2: memref<32x1xf32, #tpu.memory_space<vmem>>, %arg3: memref<32x1xf32, #tpu.memory_space<vmem>>, %arg4: memref<32x1xf32, #tpu.memory_space<vmem>>, %arg5: memref<1x1xf32, #tpu.memory_space<smem>>, %arg6: memref<1x128xf32, #tpu.memory_space<vmem>>) attributes {dimension_semantics = [#tpu.dimension_semantics<parallel>], iteration_bounds = array<i64: 1>, scalar_prefetch = 0 : i64, scratch_operands = 0 : i64, tpu.core_type = #tpu.core_type<tc>, window_params = [{transform_indices = @transform_0, window_bounds = array<i64: 1, 128>}, {pipeline_mode = #tpu.pipeline_mode<synchronous>, transform_indices = @transform_1, window_bounds = array<i64: 32, 1>}, {pipeline_mode = #tpu.pipeline_mode<synchronous>, transform_indices = @transform_2, window_bounds = array<i64: 32, 1>}, {pipeline_mode = #tpu.pipeline_mode<synchronous>, transform_indices = @transform_3, window_bounds = array<i64: 32, 1>}, {transform_indices = @transform_4, window_bounds = array<i64: 1, 1>}, {transform_indices = @transform_5, window_bounds = array<i64: 1, 128>}]} {
    %c0 = arith.constant 0 : index
    %c0_0 = arith.constant 0 : index
    %0 = vector.load %arg2[%c0, %c0_0] : memref<32x1xf32, #tpu.memory_space<vmem>>, vector<32x1xf32>
    %c0_1 = arith.constant 0 : index
    %c0_2 = arith.constant 0 : index
    %1 = vector.load %arg3[%c0_1, %c0_2] : memref<32x1xf32, #tpu.memory_space<vmem>>, vector<32x1xf32>
    %c0_3 = arith.constant 0 : index
    %c0_4 = arith.constant 0 : index
    %2 = vector.load %arg4[%c0_3, %c0_4] : memref<32x1xf32, #tpu.memory_space<vmem>>, vector<32x1xf32>
    %c0_5 = arith.constant 0 : index
    %c0_6 = arith.constant 0 : index
    %3 = memref.load %arg5[%c0_5, %c0_6] : memref<1x1xf32, #tpu.memory_space<smem>>
    %c0_i32 = arith.constant 0 : i32
    %c128_i32 = arith.constant 128 : i32
    %4 = arith.muli %c0_i32, %c128_i32 : i32
    %5 = tpu.assume_multiple %4, 128 : i32
    %c0_7 = arith.constant 0 : index
    %6 = arith.index_cast %5 : i32 to index
    %7 = vector.load %arg1[%c0_7, %6] : memref<1x128xf32, #tpu.memory_space<vmem>>, vector<1x128xf32>
    %8 = vector.broadcast %0 : vector<32x1xf32> to vector<32x128xf32>
    %9 = vector.broadcast %7 : vector<1x128xf32> to vector<32x128xf32>
    %10 = arith.mulf %8, %9 : vector<32x128xf32>
    %11 = vector.broadcast %1 : vector<32x1xf32> to vector<32x128xf32>
    %12 = arith.addf %10, %11 : vector<32x128xf32>
    %cst = arith.constant dense<0xFF800000> : vector<128xf32>
    %13 = vector.multi_reduction <maximumf>, %12, %cst [0] : vector<32x128xf32> to vector<128xf32>
    %14 = vector.shape_cast %13 : vector<128xf32> to vector<1x128xf32>
    %15 = vector.broadcast %14 : vector<1x128xf32> to vector<32x128xf32>
    %16 = arith.subf %12, %15 : vector<32x128xf32>
    %17 = math.exp %16 : vector<32x128xf32>
    %18 = vector.broadcast %2 : vector<32x1xf32> to vector<32x128xf32>
    %19 = arith.mulf %17, %18 : vector<32x128xf32>
    %cst_8 = arith.constant dense<0.000000e+00> : vector<128xf32>
    %20 = vector.multi_reduction <add>, %19, %cst_8 [0] : vector<32x128xf32> to vector<128xf32>
    %21 = vector.shape_cast %20 : vector<128xf32> to vector<1x128xf32>
    %cst_9 = arith.constant dense<0.000000e+00> : vector<128xf32>
    %22 = vector.multi_reduction <add>, %17, %cst_9 [0] : vector<32x128xf32> to vector<128xf32>
    %23 = vector.shape_cast %22 : vector<128xf32> to vector<1x128xf32>
    %24 = arith.divf %21, %23 : vector<1x128xf32>
    %25 = vector.broadcast %3 : f32 to vector<1x128xf32>
    %26 = arith.addf %24, %25 : vector<1x128xf32>
    %c0_10 = arith.constant 0 : index
    %27 = arith.index_cast %5 : i32 to index
    %28 = vector.load %arg6[%c0_10, %27] : memref<1x128xf32, #tpu.memory_space<vmem>>, vector<1x128xf32>
    tpu.vector_store %arg6[%c0_10, %27], %26 {strides = array<i32>} : memref<1x128xf32, #tpu.memory_space<vmem>>, vector<1x128xf32>,
    %c1_i32 = arith.constant 1 : i32
    return
  }
  func.func @transform_0(%arg0: i32) -> (i32, i32) {
    %c0_i32 = arith.constant 0 : i32
    %c0_i32_0 = arith.constant 0 : i32
    return %c0_i32, %arg0 : i32, i32
  }
  func.func @transform_1(%arg0: i32) -> (i32, i32) {
    %c0_i32 = arith.constant 0 : i32
    %c0_i32_0 = arith.constant 0 : i32
    %c0_i32_1 = arith.constant 0 : i32
    return %c0_i32, %c0_i32_0 : i32, i32
  }
  func.func @transform_2(%arg0: i32) -> (i32, i32) {
    %c0_i32 = arith.constant 0 : i32
    %c0_i32_0 = arith.constant 0 : i32
    %c0_i32_1 = arith.constant 0 : i32
    return %c0_i32, %c0_i32_0 : i32, i32
  }
  func.func @transform_3(%arg0: i32) -> (i32, i32) {
    %c0_i32 = arith.constant 0 : i32
    %c0_i32_0 = arith.constant 0 : i32
    %c0_i32_1 = arith.constant 0 : i32
    return %c0_i32, %c0_i32_0 : i32, i32
  }
  func.func @transform_4(%arg0: i32) -> (i32, i32) {
    %c0_i32 = arith.constant 0 : i32
    %c0_i32_0 = arith.constant 0 : i32
    %c0_i32_1 = arith.constant 0 : i32
    return %c0_i32, %c0_i32_0 : i32, i32
  }
  func.func @transform_5(%arg0: i32) -> (i32, i32) {
    %c0_i32 = arith.constant 0 : i32
    %c0_i32_0 = arith.constant 0 : i32
    return %c0_i32, %arg0 : i32, i32
  }
}

</mosaic_0001>

<llo_original>
// kernel: tpu_custom_call.1
$region0: #{tpu_custom_call.1}
  #allocation0 [shape = 'u32[]', space=smem, size = 0x4, offset = 0x4, fixed_abs, tag = 'smem constant byte address 0x4 - core index']
  #allocation1 [shape = 'u32[144,128]{1,0:T(1,128)}', space=vmem, size = 0x12000, scoped, tag = 'internal scratch']
  #allocation2 [shape = 'f32[1,1]{1,0:T(1,128)S(6)}', space=smem, size = 0x200, scoped, tag = 'scoped memory for tpu_custom_call.1']
  %s0 = inlined_call_operand.vmem [shape: f32[1,8], index: 0, kind: input, shape index: {}]
  %s1 = inlined_call_operand.vmem [shape: f32[32,1], index: 1, kind: input, shape index: {}]
  %s2 = inlined_call_operand.vmem [shape: f32[32,1], index: 2, kind: input, shape index: {}]
  %s3 = inlined_call_operand.vmem [shape: f32[32,1], index: 3, kind: input, shape index: {}]
  %s4 = inlined_call_operand.<no memory space> [shape: f32[1,1], index: 4, kind: input, shape index: {}]
  %s5 = inlined_call_operand.hbm [shape: f32[1,8], index: 5, kind: output, shape index: {}]
  %s6 = sld [smem:[#allocation0]]
  $region30: #{tpu_custom_call.1} parent=0
    _
  %s8 = ssub.s32 1, %s6
  %s9 = scalar_select 0, %s8, %s6
  %10 = sst [smem:[#allocation2]] %s4
  $region1: #{tpu_custom_call.1} parent=0
    #allocation3 [shape = 'u8[512]{0}', space=vmem, size = 0x400, scoped, tag = 'output window, operand 0, single buffered']
    #allocation4 [shape = 's32[1]{0}', space=sflag, size = 0x4, scoped, tag = 'scoped memory for tpu_custom_call.1']
    %11 = vsyncpa [#allocation4], 0
    // Predicated region
    $region2: #{tpu_custom_call.1} parent=1 // pred_check
      _
    $region3: #{tpu_custom_call.1} parent=1 // pred_check_branch
      %13 = sbr.rel (0) target = $region5
    $region4: #{tpu_custom_call.1} parent=1 // pred_region
      _
    $region5: #{tpu_custom_call.1} parent=1 // pred_fallthru
      _
    // Predicated region
    $region6: #{tpu_custom_call.1} parent=1 // pred_check
      _
    $region7: #{tpu_custom_call.1} parent=1 // pred_check_branch
      %15 = sbr.rel (0) target = $region9
    $region8: #{tpu_custom_call.1} parent=1 // pred_region
      _
    $region9: #{tpu_custom_call.1} parent=1 // pred_fallthru
      _
    // Predicated region
    $region10: #{tpu_custom_call.1} parent=1 // pred_check
      _
    $region11: #{tpu_custom_call.1} parent=1 // pred_check_branch
      %17 = sbr.rel (0) target = $region13
    $region12: #{tpu_custom_call.1} parent=1 // pred_region
      _
    $region13: #{tpu_custom_call.1} parent=1 // pred_fallthru
      _
    // Predicated region
    $region14: #{tpu_custom_call.1} parent=1 // pred_check
      _
    $region15: #{tpu_custom_call.1} parent=1 // pred_check_branch
      %19 = sbr.rel (0) target = $region17
    $region16: #{tpu_custom_call.1} parent=1 // pred_region
      _
    $region17: #{tpu_custom_call.1} parent=1 // pred_fallthru
      _
    // Predicated region
    $region18: #{tpu_custom_call.1} parent=1 // pred_check
      _
    $region19: #{tpu_custom_call.1} parent=1 // pred_check_branch
      %21 = sbr.rel (0) target = $region21
    $region20: #{tpu_custom_call.1} parent=1 // pred_region
      _
    $region21: #{tpu_custom_call.1} parent=1 // pred_fallthru
      _
    %v22 = vld [vmem:[%s1] sm:$0xff]
    %v23 = vld [vmem:[%s1 + $0x8] sm:$0xff]
    %v24 = vld [vmem:[%s1 + $0x10] sm:$0xff]
    %v25 = vld [vmem:[%s1 + $0x18] sm:$0xff]
    %v26 = vld [vmem:[%s2] sm:$0xff]
    %v27 = vld [vmem:[%s2 + $0x8] sm:$0xff]
    %v28 = vld [vmem:[%s2 + $0x10] sm:$0xff]
    %v29 = vld [vmem:[%s2 + $0x18] sm:$0xff]
    %v30 = vld [vmem:[%s3] sm:$0xff]
    %v31 = vld [vmem:[%s3 + $0x8] sm:$0xff]
    %v32 = vld [vmem:[%s3 + $0x10] sm:$0xff]
    %v33 = vld [vmem:[%s3 + $0x18] sm:$0xff]
    %s34 = sld [smem:[#allocation2]]
    %v35 = vld [vmem:[%s0] sm:$0x1]
    %37 = vset.pattern.permute.xlu0 0
    %38 = vperm.xlu0 %37, %v22
    %v39 = vpop.permute.xlu0 %38
    %42 = vset.pattern.permute.xlu0 0
    %43 = vperm.xlu0 %42, %v23
    %v44 = vpop.permute.xlu0 %43
    %47 = vset.pattern.permute.xlu0 0
    %48 = vperm.xlu0 %47, %v24
    %v49 = vpop.permute.xlu0 %48
    %52 = vset.pattern.permute.xlu0 0
    %53 = vperm.xlu0 %52, %v25
    %v54 = vpop.permute.xlu0 %53
    %v57 = vlaneseq
    %v58 = vshrl.u32 %v57, 7
    %v59 = vsub.s32 0, %v58
    %v60 = vrot.slane %v35, %v59
    %v62 = vmul.f32 %v39, %v60
    %v63 = vmul.f32 %v44, %v60
    %v64 = vmul.f32 %v49, %v60
    %v65 = vmul.f32 %v54, %v60
    %67 = vset.pattern.permute.xlu0 0
    %68 = vperm.xlu0 %67, %v26
    %v69 = vpop.permute.xlu0 %68
    %72 = vset.pattern.permute.xlu0 0
    %73 = vperm.xlu0 %72, %v27
    %v74 = vpop.permute.xlu0 %73
    %77 = vset.pattern.permute.xlu0 0
    %78 = vperm.xlu0 %77, %v28
    %v79 = vpop.permute.xlu0 %78
    %82 = vset.pattern.permute.xlu0 0
    %83 = vperm.xlu0 %82, %v29
    %v84 = vpop.permute.xlu0 %83
    %v86 = vadd.f32 %v62, %v69
    %v87 = vadd.f32 %v63, %v74
    %v88 = vadd.f32 %v64, %v79
    %v89 = vadd.f32 %v65, %v84
    %v90 = vmax.f32 %v86, %v87
    %v91 = vmax.f32 %v88, %v89
    %v92 = vmax.f32 %v90, %v91
    %v93 = vrot.slane %v92, 4
    %v94 = vmax.f32 %v92, %v93
    %v95 = vrot.slane %v94, 2
    %v96 = vmax.f32 %v94, %v95
    %v97 = vrot.slane %v96, 1
    %v98 = vmax.f32 %v96, %v97
    %v99 = vsub.f32 %v86, %v98
    %v100 = vsub.f32 %v87, %v98
    %v101 = vsub.f32 %v88, %v98
    %v102 = vsub.f32 %v89, %v98
    %v103 = vmul.f32 %v99, 1.442695
    %v104 = vpow.pop %v103
    %v105 = vmul.f32 %v100, 1.442695
    %v106 = vpow.pop %v105
    %v107 = vmul.f32 %v101, 1.442695
    %v108 = vpow.pop %v107
    %v109 = vmul.f32 %v102, 1.442695
    %v110 = vpow.pop %v109
    %112 = vset.pattern.permute.xlu0 0
    %113 = vperm.xlu0 %112, %v30
    %v114 = vpop.permute.xlu0 %113
    %117 = vset.pattern.permute.xlu0 0
    %118 = vperm.xlu0 %117, %v31
    %v119 = vpop.permute.xlu0 %118
    %122 = vset.pattern.permute.xlu0 0
    %123 = vperm.xlu0 %122, %v32
    %v124 = vpop.permute.xlu0 %123
    %127 = vset.pattern.permute.xlu0 0
    %128 = vperm.xlu0 %127, %v33
    %v129 = vpop.permute.xlu0 %128
    %v131 = vmul.f32 %v104, %v114
    %v132 = vmul.f32 %v106, %v119
    %v133 = vmul.f32 %v108, %v124
    %v134 = vmul.f32 %v110, %v129
    %v135 = vadd.f32 %v131, %v132
    %v136 = vadd.f32 %v135, %v133
    %v137 = vadd.f32 %v136, %v134
    %v138 = vrot.slane %v137, 4
    %v139 = vadd.f32 %v137, %v138
    %v140 = vrot.slane %v139, 2
    %v141 = vadd.f32 %v139, %v140
    %v142 = vrot.slane %v141, 1
    %v143 = vadd.f32 %v141, %v142
    %v144 = vadd.f32 %v104, %v106
    %v145 = vadd.f32 %v144, %v108
    %v146 = vadd.f32 %v145, %v110
    %v147 = vrot.slane %v146, 4
    %v148 = vadd.f32 %v146, %v147
    %v149 = vrot.slane %v148, 2
    %v150 = vadd.f32 %v148, %v149
    %v151 = vrot.slane %v150, 1
    %v152 = vadd.f32 %v150, %v151
    %v153 = vrcp.pop %v152
    %v154 = vmul.f32 %v143, %v153
    %v155 = vstv %s34
    %v156 = vadd.f32 %v154, %v155
    %157 = vst [vmem:[#allocation3] sm:$0x1] %v156
    // Predicated region
    $region22: #{tpu_custom_call.1} parent=1 // pred_check
      _
    $region23: #{tpu_custom_call.1} parent=1 // pred_check_branch
      %159 = sbr.rel (0) target = $region25
    $region24: #{tpu_custom_call.1} parent=1 // pred_region
      %s161 = ssub.s32 16, 16
      %162 = vsyncadd [#allocation4], %s161
      %s164 = sshll.u32 [#allocation3], 4
      %s165 = int_to_ptr.vmem [resolvable:$true] %s164
      %167 = dma.vmem_to_hbm [thread:$0]  %s165, 16, %s5, [#allocation4]
    $region25: #{tpu_custom_call.1} parent=1 // pred_fallthru
      _
    // Predicated region
    $region26: #{tpu_custom_call.1} parent=1 // pred_check
      _
    $region27: #{tpu_custom_call.1} parent=1 // pred_check_branch
      %169 = sbr.rel (0) target = $region29
    $region28: #{tpu_custom_call.1} parent=1 // pred_region
      %170 = dma.done [#allocation4], 16
    $region29: #{tpu_custom_call.1} parent=1 // pred_fallthru
      _
    %171 = vsyncpa [#allocation4], 1

</llo_original>
